<compile_context>
chip_gen: v6e
topology: v6e:2x2x1
jax: 0.10.0
libtpu: 0.0.40
codegen_flags: <defaults>
</compile_context>

<pallas_src>
import functools

import jax
import jax.numpy as jnp
from jax import lax
from jax.experimental import pallas as pl
from jax.experimental.pallas import tpu as pltpu

_LANES = 128
_MAX_TILE_ROWS = 8192            # 8192 x 128 x 4 B = 4 MiB per f32 buffer
_VMEM_LIMIT = 32 * 1024 * 1024   # in+out, double buffered 4 MiB tiles = 16 MiB (+headroom)

_C1 = -2048144789                # int32 view of 0x85EBCA6B (murmur3 fmix32)
_C2 = -1028477387                # int32 view of 0xC2B2AE35


def _lsr(v, amount):
    """Logical right shift on int32: arithmetic shift + mask of sign-extended bits."""
    return (v >> amount) & ((1 << (32 - amount)) - 1)


def _stochastic_relu_kernel(sc_ref, x_ref, o_ref, *, low, high, tile_rows):
    """sc_ref (SMEM, int32[3]) = [r, w, seed]; x_ref / o_ref: (tile_rows, 128)."""
    r = sc_ref[0]
    w = sc_ref[1]
    seed = sc_ref[2]

    # ---- K ~ U[low, high): counter-based hash of the global flat index ------
    # Grid/tile invariant and portable (no TPU-only PRNG primitives).
    row_ids = lax.broadcasted_iota(jnp.int32, (tile_rows, _LANES), 0)
    lane_ids = lax.broadcasted_iota(jnp.int32, (tile_rows, _LANES), 1)
    gidx = (pl.program_id(0) * tile_rows + row_ids) * _LANES + lane_ids
    h = gidx ^ seed
    h = h ^ _lsr(h, 16)
    h = h * _C1
    h = h ^ _lsr(h, 13)
    h = h * _C2
    h = h ^ _lsr(h, 16)
    bits = h & 0x7FFFFF                                   # 23 random bits, >= 0
    # affine map folded: k = bits * (high-low)/2^23 + low  ->  uniform in [low, high)
    k = bits.astype(jnp.float32) * jnp.float32((high - low) / float(1 << 23)) \
        + jnp.float32(low)

    # ---- branch logic (scalar predicates; NaN/Inf propagate like torch.where)
    x = x_ref[...].astype(jnp.float32)
    thr = w.astype(jnp.float32) / jnp.float32(10.0)       # torch: w / 10 (true division)
    take_relu = r < 3
    take_thr = w != 0

    y1 = jnp.where(take_relu, jnp.maximum(x, 0.0), x)     # where(r<3, relu(x), x)
    y2 = jnp.where(take_thr,
                   jnp.where(y1 <= thr, jnp.float32(0.0), y1),
                   jnp.maximum(y1, 0.0))                  # where(w!=0, thresholded, relu)
    offset = jnp.where(take_thr, thr, jnp.float32(0.0))   # scalar, added once

    o_ref[...] = (y2 * k + offset).astype(o_ref.dtype)


def stochastic_relu_forward(x, rng_scalars, *, low, high):
    """Pallas-backed stochasticReLU forward.

    x: float array of any shape (module uses NCHW); rng_scalars: int32[3] = [r, w, seed].
    """
    shape = x.shape
    n = x.size
    rows = -(-n // _LANES)
    padded = rows * _LANES != n

    xf = x.reshape(-1)
    if padded:
        # Rare ragged-tail fallback; UNet NCHW activations are normally 128-divisible,
        # so the common case is a pure reshape with zero extra HBM traffic.
        xf = jnp.pad(xf, (0, rows * _LANES - n))
    x2d = xf.reshape(rows, _LANES)

    if rows <= _MAX_TILE_ROWS:
        tile_rows = rows                  # single full-extent block (no (8,128) constraint)
    else:
        tile_rows = _MAX_TILE_ROWS        # multiple of 8; last grid block may be partial
    grid = -(-rows // tile_rows)

    out2d = pl.pallas_call(
        functools.partial(_stochastic_relu_kernel,
                          low=float(low), high=float(high), tile_rows=tile_rows),
        out_shape=jax.ShapeDtypeStruct((rows, _LANES), x.dtype),
        grid_spec=pltpu.PrefetchScalarGridSpec(
            num_scalar_prefetch=1,
            grid=(grid,),
            in_specs=[pl.BlockSpec((tile_rows, _LANES), lambda i, sc: (i, 0))],
            out_specs=pl.BlockSpec((tile_rows, _LANES), lambda i, sc: (i, 0)),
        ),
        compiler_params=pltpu.CompilerParams(
            dimension_semantics=("parallel",),
            vmem_limit_bytes=_VMEM_LIMIT,
        ),
    )(rng_scalars.astype(jnp.int32), x2d)

    out = out2d.reshape(-1)
    if padded:
        out = out[:n]
    return out.reshape(shape)


if __name__ == "__main__":
    low, high = 0.5, 1.5                       # stochasticReLU(low, high)
    N, C, H, W = 2, 4, 16, 16

    key = jax.random.PRNGKey(0)
    kx, kr, kw, ks = jax.random.split(key, 4)
    x = jax.random.normal(kx, (N, C, H, W), jnp.float32)
    r = jax.random.randint(kr, (), 1, 4, dtype=jnp.int32)        # torch.randint(1, 4)
    w = jax.random.randint(kw, (), -5, 5, dtype=jnp.int32)       # torch.randint(-5, 5)
    seed = jax.random.randint(ks, (), 0, 2**31 - 1, dtype=jnp.int32)
    rng_scalars = jnp.stack([r, w, seed])

    fwd = jax.jit(functools.partial(stochastic_relu_forward, low=low, high=high))
    out = jax.block_until_ready(fwd(x, rng_scalars))
    assert out.shape == x.shape and out.dtype == jnp.float32, (out.shape, out.dtype)

    # ---- semantic check: K is drawn in-kernel, so verify the algebraic form ----
    # out must equal y * K + offset with K in [low, high), where y / offset are the
    # deterministic (given r, w) relu/threshold stage reproduced here in pure JAX.
    r_v, w_v = int(r), int(w)
    y = jnp.where(r_v < 3, jnp.maximum(x, 0.0), x)
    thr = w_v / 10.0
    if w_v != 0:
        y = jnp.where(y <= thr, 0.0, y)
        offset = thr
    else:
        y = jnp.maximum(y, 0.0)
        offset = 0.0

    assert bool(jnp.all(jnp.isfinite(out)))
    big = jnp.abs(y) > 1e-3
    k_rec = (out - offset) / jnp.where(big, y, 1.0)
    ok_big = jnp.all(jnp.where(big, (k_rec >= low - 1e-2) & (k_rec <= high + 1e-2), True))
    assert bool(ok_big), "recovered K outside [low, high) where |y| is large"
    small_err = float(jnp.max(jnp.abs(jnp.where(big, 0.0, out - offset))))
    assert small_err < 2e-3, f"mismatch where y ~ 0: {small_err}"

    print("KERNEL_OK")
</pallas_src>

<mosaic_0001>
module attributes {stable_mosaic.version = 11 : i64} {
  func.func @_stochastic_relu_kernel(%arg0: i32, %arg1: memref<3xi32, #tpu.memory_space<smem>>, %arg2: memref<16x128xf32, #tpu.memory_space<vmem>>, %arg3: memref<16x128xf32, #tpu.memory_space<vmem>>) attributes {dimension_semantics = [#tpu.dimension_semantics<parallel>], iteration_bounds = array<i64: 1>, scalar_prefetch = 1 : i64, scratch_operands = 0 : i64, tpu.core_type = #tpu.core_type<tc>, window_params = [{transform_indices = @transform_0, window_bounds = array<i64: 16, 128>}, {transform_indices = @transform_1, window_bounds = array<i64: 16, 128>}]} {
    %c0 = arith.constant 0 : index
    %0 = memref.load %arg1[%c0] : memref<3xi32, #tpu.memory_space<smem>>
    %c1 = arith.constant 1 : index
    %1 = memref.load %arg1[%c1] : memref<3xi32, #tpu.memory_space<smem>>
    %c2 = arith.constant 2 : index
    %2 = memref.load %arg1[%c2] : memref<3xi32, #tpu.memory_space<smem>>
    %3 = tpu.iota {dimensions = array<i32: 0>} : vector<16x128xi32>
    %4 = tpu.iota {dimensions = array<i32: 1>} : vector<16x128xi32>
    %c16_i32 = arith.constant 16 : i32
    %5 = arith.muli %arg0, %c16_i32 : i32
    %6 = vector.broadcast %5 : i32 to vector<16x128xi32>
    %7 = arith.addi %6, %3 : vector<16x128xi32>
    %c128_i32 = arith.constant 128 : i32
    %8 = vector.broadcast %c128_i32 : i32 to vector<16x128xi32>
    %9 = arith.muli %7, %8 : vector<16x128xi32>
    %10 = arith.addi %9, %4 : vector<16x128xi32>
    %11 = vector.broadcast %2 : i32 to vector<16x128xi32>
    %12 = arith.xori %10, %11 : vector<16x128xi32>
    %c16_i32_0 = arith.constant 16 : i32
    %13 = vector.broadcast %c16_i32_0 : i32 to vector<16x128xi32>
    %14 = arith.shrsi %12, %13 : vector<16x128xi32>
    %c65535_i32 = arith.constant 65535 : i32
    %15 = vector.broadcast %c65535_i32 : i32 to vector<16x128xi32>
    %16 = arith.andi %14, %15 : vector<16x128xi32>
    %17 = arith.xori %12, %16 : vector<16x128xi32>
    %c-2048144789_i32 = arith.constant -2048144789 : i32
    %18 = vector.broadcast %c-2048144789_i32 : i32 to vector<16x128xi32>
    %19 = arith.muli %17, %18 : vector<16x128xi32>
    %c13_i32 = arith.constant 13 : i32
    %20 = vector.broadcast %c13_i32 : i32 to vector<16x128xi32>
    %21 = arith.shrsi %19, %20 : vector<16x128xi32>
    %c524287_i32 = arith.constant 524287 : i32
    %22 = vector.broadcast %c524287_i32 : i32 to vector<16x128xi32>
    %23 = arith.andi %21, %22 : vector<16x128xi32>
    %24 = arith.xori %19, %23 : vector<16x128xi32>
    %c-1028477387_i32 = arith.constant -1028477387 : i32
    %25 = vector.broadcast %c-1028477387_i32 : i32 to vector<16x128xi32>
    %26 = arith.muli %24, %25 : vector<16x128xi32>
    %c16_i32_1 = arith.constant 16 : i32
    %27 = vector.broadcast %c16_i32_1 : i32 to vector<16x128xi32>
    %28 = arith.shrsi %26, %27 : vector<16x128xi32>
    %c65535_i32_2 = arith.constant 65535 : i32
    %29 = vector.broadcast %c65535_i32_2 : i32 to vector<16x128xi32>
    %30 = arith.andi %28, %29 : vector<16x128xi32>
    %31 = arith.xori %26, %30 : vector<16x128xi32>
    %c8388607_i32 = arith.constant 8388607 : i32
    %32 = vector.broadcast %c8388607_i32 : i32 to vector<16x128xi32>
    %33 = arith.andi %31, %32 : vector<16x128xi32>
    %34 = arith.sitofp %33 : vector<16x128xi32> to vector<16x128xf32>
    %cst = arith.constant 1.1920929E-7 : f32
    %35 = vector.broadcast %cst : f32 to vector<16x128xf32>
    %36 = arith.mulf %34, %35 : vector<16x128xf32>
    %cst_3 = arith.constant 5.000000e-01 : f32
    %37 = vector.broadcast %cst_3 : f32 to vector<16x128xf32>
    %38 = arith.addf %36, %37 : vector<16x128xf32>
    %c0_4 = arith.constant 0 : index
    %c0_5 = arith.constant 0 : index
    %39 = vector.load %arg2[%c0_4, %c0_5] : memref<16x128xf32, #tpu.memory_space<vmem>>, vector<16x128xf32>
    %40 = arith.sitofp %1 : i32 to f32
    %cst_6 = arith.constant 1.000000e+01 : f32
    %41 = arith.divf %40, %cst_6 : f32
    %c3_i32 = arith.constant 3 : i32
    %42 = arith.cmpi slt, %0, %c3_i32 : i32
    %c0_i32 = arith.constant 0 : i32
    %43 = arith.cmpi ne, %1, %c0_i32 : i32
    %cst_7 = arith.constant 0.000000e+00 : f32
    %44 = vector.broadcast %cst_7 : f32 to vector<16x128xf32>
    %45 = arith.maximumf %39, %44 : vector<16x128xf32>
    %46 = arith.select %42, %45, %39 : vector<16x128xf32>
    %47 = vector.broadcast %41 : f32 to vector<16x128xf32>
    %48 = arith.cmpf ole, %46, %47 : vector<16x128xf32>
    %cst_8 = arith.constant 0.000000e+00 : f32
    %49 = vector.broadcast %cst_8 : f32 to vector<16x128xf32>
    %50 = arith.select %48, %49, %46 : vector<16x128xi1>, vector<16x128xf32>
    %cst_9 = arith.constant 0.000000e+00 : f32
    %51 = vector.broadcast %cst_9 : f32 to vector<16x128xf32>
    %52 = arith.maximumf %46, %51 : vector<16x128xf32>
    %53 = arith.select %43, %50, %52 : vector<16x128xf32>
    %cst_10 = arith.constant 0.000000e+00 : f32
    %54 = arith.select %43, %41, %cst_10 : f32
    %55 = arith.mulf %53, %38 : vector<16x128xf32>
    %56 = vector.broadcast %54 : f32 to vector<16x128xf32>
    %57 = arith.addf %55, %56 : vector<16x128xf32>
    %c0_11 = arith.constant 0 : index
    %c0_12 = arith.constant 0 : index
    %58 = vector.load %arg3[%c0_11, %c0_12] : memref<16x128xf32, #tpu.memory_space<vmem>>, vector<16x128xf32>
    tpu.vector_store %arg3[%c0_11, %c0_12], %57 {strides = array<i32>} : memref<16x128xf32, #tpu.memory_space<vmem>>, vector<16x128xf32>,
    return
  }
  func.func @transform_0(%arg0: i32, %arg1: memref<3xi32, #tpu.memory_space<smem>>) -> (i32, i32) {
    %c0_i32 = arith.constant 0 : i32
    %c0_i32_0 = arith.constant 0 : i32
    return %arg0, %c0_i32 : i32, i32
  }
  func.func @transform_1(%arg0: i32, %arg1: memref<3xi32, #tpu.memory_space<smem>>) -> (i32, i32) {
    %c0_i32 = arith.constant 0 : i32
    %c0_i32_0 = arith.constant 0 : i32
    return %arg0, %c0_i32 : i32, i32
  }
}

</mosaic_0001>

<llo_original>
// kernel: stochastic_relu_forward.1
$region0: #{stochastic_relu_forward.1}
  #allocation0 [shape = 'u32[]', space=smem, size = 0x4, offset = 0x4, fixed_abs, tag = 'smem constant byte address 0x4 - core index']
  #allocation1 [shape = 'u32[144,128]{1,0:T(1,128)}', space=vmem, size = 0x12000, scoped, tag = 'internal scratch']
  #allocation2 [shape = 's32[1]{0}', space=sflag, size = 0x4, scoped, tag = 'scoped memory for stochastic_relu_forward.1']
  #allocation3 [shape = 'u8[512]{0}', space=smem, size = 0x200, scoped, tag = 'prefetched SMEM operand 0']
  %s0 = inlined_call_operand.vmem [shape: s32[3], index: 0, kind: input, shape index: {}]
  %s1 = inlined_call_operand.vmem [shape: f32[16,128], index: 1, kind: input, shape index: {}]
  %s2 = inlined_call_operand.vmem [shape: f32[16,128], index: 2, kind: output, shape index: {}]
  %s3 = sld [smem:[#allocation0]]
  $region14: #{stochastic_relu_forward.1} parent=0
    _
  %s5 = ssub.s32 1, %s3
  %s6 = scalar_select 0, %s5, %s3
  %s7 = sshll.u32 %s0, 4
  %s8 = int_to_ptr.vmem [resolvable:$true] %s7
  %10 = dma.vmem_to_smem %s8, 16, [#allocation3], [#allocation2]
  %11 = dma.done [#allocation2], 16
  %12 = sfence
  // Predicated region
  $region2: #{stochastic_relu_forward.1} parent=0 // pred_check
    _
  $region3: #{stochastic_relu_forward.1} parent=0 // pred_check_branch
    %14 = sbr.rel (0) target = $region5
  $region4: #{stochastic_relu_forward.1} parent=0 // pred_region
    _
  $region5: #{stochastic_relu_forward.1} parent=0 // pred_fallthru
    _
  %s15 = sld [smem:[#allocation3]]
  %s16 = sld [smem:[#allocation3 + $0x1]]
  %s17 = sld [smem:[#allocation3 + $0x2]]
  %v18 = vlaneseq
  %v19 = vshrl.u32 %v18, 7
  %v20 = vadd.s32 %v19, 8
  %v21 = vlaneseq
  %v22 = vand.u32 %v21, 127
  %s23 = smul.u32 0, 16
  %v24 = vstv %s23
  %v25 = vadd.s32 %v24, %v19
  %v26 = vadd.s32 %v24, %v20
  %v27 = vmul.u32 %v25, 128
  %v28 = vmul.u32 %v26, 128
  %v29 = vadd.s32 %v27, %v22
  %v30 = vadd.s32 %v28, %v22
  %v31 = vstv %s17
  %v32 = vxor.u32 %v29, %v31
  %v33 = vxor.u32 %v30, %v31
  %v34 = vshra.s32 %v32, 16
  %v35 = vshra.s32 %v33, 16
  %v36 = vand.u32 %v34, 65535
  %v37 = vand.u32 %v35, 65535
  %v38 = vxor.u32 %v32, %v36
  %v39 = vxor.u32 %v33, %v37
  %v40 = vmul.u32 %v38, 2246822507
  %v41 = vmul.u32 %v39, 2246822507
  %v42 = vshra.s32 %v40, 13
  %v43 = vshra.s32 %v41, 13
  %v44 = vand.u32 %v42, 524287
  %v45 = vand.u32 %v43, 524287
  %v46 = vxor.u32 %v40, %v44
  %v47 = vxor.u32 %v41, %v45
  %v48 = vmul.u32 %v46, 3266489909
  %v49 = vmul.u32 %v47, 3266489909
  %v50 = vshra.s32 %v48, 16
  %v51 = vshra.s32 %v49, 16
  %v52 = vand.u32 %v50, 65535
  %v53 = vand.u32 %v51, 65535
  %v54 = vxor.u32 %v48, %v52
  %v55 = vxor.u32 %v49, %v53
  %v56 = vand.u32 %v54, 8388607
  %v57 = vand.u32 %v55, 8388607
  %v58 = vcvt.s32.f32 %v56
  %v59 = vcvt.s32.f32 %v57
  %v60 = vmul.f32 %v58, 1.1920929e-07
  %v61 = vmul.f32 %v59, 1.1920929e-07
  %v62 = vadd.f32 %v60, 0.5
  %v63 = vadd.f32 %v61, 0.5
  %v64 = vld [vmem:[%s1] sm:$0xff]
  %v65 = vld [vmem:[%s1 + $0x8] sm:$0xff]
  %s66 = scvt.s32.f32 %s16
  %v67 = vrcp.pop 10.0
  %s68 = vtos %v67
  %s69 = smul.f32 %s66, %s68
  %p70 = scmp.lt.s32.totalorder %s15, 3
  %p71 = scmp.ne.s32.totalorder %s16, 0
  %v72 = vmax.f32 %v64, 0.0
  %v73 = vmax.f32 %v65, 0.0
  %s74 = scalar_select %p70, 1, 0
  %v75 = vstv %s74
  %vm76 = vcmp.eq.s32.totalorder %v75, 1
  %v77 = vsel %vm76, %v72, %v64
  %v78 = vsel %vm76, %v73, %v65
  %v79 = vstv %s69
  %vm80 = vcmp.le.f32.partialorder %v77, %v79
  %vm81 = vcmp.le.f32.partialorder %v78, %v79
  %v82 = vsel %vm80, 0.0, %v77
  %v83 = vsel %vm81, 0.0, %v78
  %v84 = vmax.f32 %v77, 0.0
  %v85 = vmax.f32 %v78, 0.0
  %s86 = scalar_select %p71, 1, 0
  %v87 = vstv %s86
  %vm88 = vcmp.eq.s32.totalorder %v87, 1
  %v89 = vsel %vm88, %v82, %v84
  %v90 = vsel %vm88, %v83, %v85
  %s91 = scalar_select %p71, %s69, 0.0
  %v92 = vmul.f32 %v89, %v62
  %v93 = vmul.f32 %v90, %v63
  %v94 = vstv %s91
  %v95 = vadd.f32 %v92, %v94
  %v96 = vadd.f32 %v93, %v94
  %97 = vst [vmem:[%s2] sm:$0xff] %v95
  %98 = vst [vmem:[%s2 + $0x8] sm:$0xff] %v96
  // Predicated region
  $region6: #{stochastic_relu_forward.1} parent=0 // pred_check
    _
  $region7: #{stochastic_relu_forward.1} parent=0 // pred_check_branch
    %100 = sbr.rel (0) target = $region9
  $region8: #{stochastic_relu_forward.1} parent=0 // pred_region
    _
  $region9: #{stochastic_relu_forward.1} parent=0 // pred_fallthru
    _
  // Predicated region
  $region10: #{stochastic_relu_forward.1} parent=0 // pred_check
    _
  $region11: #{stochastic_relu_forward.1} parent=0 // pred_check_branch
    %102 = sbr.rel (0) target = $region13
  $region12: #{stochastic_relu_forward.1} parent=0 // pred_region
    _
  $region13: #{stochastic_relu_forward.1} parent=0 // pred_fallthru
    _

</llo_original>
